<compile_context>
chip_gen: v7x
topology: tpu7x:2x2x1
jax: 0.10.0
libtpu: 0.0.40
codegen_flags: <defaults>
</compile_context>

<pallas_src>
import functools

import jax
import jax.numpy as jnp
from jax.experimental import pallas as pl
from jax.experimental.pallas import tpu as pltpu

_MAX_ROWS = 128  # flattened rows per grid step: one MXU pass on v5e, one full vreg lane width


def _sim_matrix_loss_kernel(x_ref, a_ref, b_ref, seg_ref, out_ref, *, gamma):
    # x_ref:   (BN, D)   BN = GB*L*Ns flattened embeddings for GB groups (f32 or bf16)
    # a_ref:   (BN, BN)  (2/denom) * blockdiag(W o (1 - I))
    # b_ref:   (BN, BN)  (2/denom) * blockdiag(W o (S - max_sim*I))
    # seg_ref: (GB, BN)  seg[g, p] = 1 iff row p belongs to group g
    # out_ref: (1, GB, 1)
    BN, _ = x_ref.shape

    x = x_ref[...]
    x32 = x.astype(jnp.float32)

    # All pairwise inner products for every (group, utterance) block in ONE lane-dense
    # MXU contraction: gram[p, q] = <x[p], x[q]>.
    gram = jax.lax.dot_general(x, x, (((1,), (1,)), ((), ())),
                               preferred_element_type=jnp.float32)      # (BN, BN)

    # Squared norms: column orientation directly from x (cheap lane reduce over D);
    # row orientation from the Gram diagonal via one masked sublane reduce -- this
    # avoids an in-kernel (BN,1)->(1,BN) transpose/relayout.
    n_col = jnp.sum(x32 * x32, axis=-1, keepdims=True)                  # (BN, 1)
    rows = jax.lax.broadcasted_iota(jnp.int32, (BN, BN), 0)
    cols = jax.lax.broadcasted_iota(jnp.int32, (BN, BN), 1)
    eye = (rows == cols).astype(jnp.float32)
    n_row = jnp.sum(gram * eye, axis=0, keepdims=True)                  # (1, BN)

    # Pairwise squared distances; clamp tiny negatives from cancellation before sqrt.
    # Cross-(group, utterance) entries are meaningless here but are exactly zeroed by
    # the block-diagonal a_ref / b_ref below.
    d2 = jnp.maximum(n_col + n_row - 2.0 * gram, 0.0)                   # (BN, BN)
    kd = jnp.exp(-gamma * jnp.sqrt(d2))                                 # 128-lane-dense EUP chain

    # wdiff = (2/denom) * blockdiag(W o ((Kd - Kd o I) - (S - max_sim*I)))
    wdiff = a_ref[...] * kd - b_ref[...]
    wsq = wdiff * wdiff

    # Per-group Frobenius sums: segment-matrix matmul (MXU) + one lane reduce.
    grp = jax.lax.dot_general(seg_ref[...], wsq, (((1,), (0,)), ((), ())),
                              preferred_element_type=jnp.float32)       # (GB, BN)
    per_g = jnp.sum(grp, axis=-1, keepdims=True)                        # (GB, 1)

    # Scale/2 and 1/denom were folded into a_ref/b_ref, so this is the final loss.
    out_ref[...] = jnp.sqrt(per_g)[None]                                # (1, GB, 1)


def _loss_core(x, simmat, W, gamma, max_sim):
    """x: (G, L, Ns, D) embeddings (f32 or bf16, dtype preserved). Returns (G,) losses."""
    num_groups, L, Ns, D = x.shape
    LNs = L * Ns

    # Groups per grid step: keep BN = GB*L*Ns <= 128 so the Gram fits one MXU pass on
    # every TPU generation and the pairwise chain is fully lane-dense.
    GB = max(1, min(num_groups, _MAX_ROWS // LNs))
    g_pad = ((num_groups + GB - 1) // GB) * GB
    if g_pad != num_groups:
        x = jnp.concatenate(
            [x, jnp.zeros((g_pad - num_groups,) + x.shape[1:], x.dtype)], axis=0)
    num_blocks = g_pad // GB
    BN = GB * LNs

    # Flatten in the wrapper so the kernel block is already (BN, D): no in-kernel reshape.
    xf = x.reshape(g_pad * LNs, D)

    # ---- group-invariant math, hoisted out of the grid -------------------------------
    f32 = jnp.float32
    eye_ns = jnp.eye(Ns, dtype=f32)
    Wp = W[:Ns, :Ns].astype(f32)
    Sp = simmat[:Ns, :Ns].astype(f32)
    s_tilde = Sp - max_sim * eye_ns
    # ||repeat(W - I, L)||_F = sqrt(L) * ||W - I||_F  (0 if W == I -> inf/nan loss,
    # inherited from the reference semantics).
    denom = jnp.sqrt(f32(L)) * jnp.sqrt(jnp.sum((Wp - eye_ns) ** 2))
    scale = 2.0 / denom
    nblk = GB * L  # independent (group, utterance) blocks per grid step
    A = jnp.kron(jnp.eye(nblk, dtype=f32), (Wp * (1.0 - eye_ns)) * scale)   # (BN, BN)
    B = jnp.kron(jnp.eye(nblk, dtype=f32), (Wp * s_tilde) * scale)          # (BN, BN)
    seg = jnp.kron(jnp.eye(GB, dtype=f32), jnp.ones((1, LNs), f32))         # (GB, BN)

    kernel = functools.partial(_sim_matrix_loss_kernel, gamma=float(gamma))
    out = pl.pallas_call(
        kernel,
        out_shape=jax.ShapeDtypeStruct((num_blocks, GB, 1), jnp.float32),
        grid=(num_blocks,),
        in_specs=[
            pl.BlockSpec((BN, D), lambda g: (g, 0)),       # GB groups of embeddings per step
            pl.BlockSpec((BN, BN), lambda g: (0, 0)),      # A   (constant block -> no re-DMA)
            pl.BlockSpec((BN, BN), lambda g: (0, 0)),      # B   (constant block)
            pl.BlockSpec((GB, BN), lambda g: (0, 0)),      # seg (constant block)
        ],
        out_specs=pl.BlockSpec((1, GB, 1), lambda g: (g, 0, 0)),  # GB losses per store
        compiler_params=pltpu.CompilerParams(
            dimension_semantics=("parallel",),             # v7x: grid blocks split across TCs
            vmem_limit_bytes=32 * 1024 * 1024,             # headroom if GB / BN grow
        ),
    )(xf, A, B, seg)
    return out.reshape(num_blocks * GB)[:num_groups]


@functools.partial(jax.jit, static_argnames=("gamma", "max_sim"))
def _single_impl(d_vectors, simmat, W, gamma, max_sim):
    # Natural stacked layout (1, L, Ns, D): no host transpose; stack/slice fused with the call.
    x = jnp.stack(d_vectors, axis=0)[None]
    return _loss_core(x, simmat, W, gamma, max_sim)[0]


@functools.partial(jax.jit, static_argnames=("gamma", "max_sim"))
def _batched_impl(x, simmat, W, gamma, max_sim):
    return _loss_core(x, simmat, W, gamma, max_sim)


def sim_matrix_loss(d_vectors, simmat, W, gamma=1.0, max_sim=1.0):
    """Pallas implementation of SimMatrixLoss.forward (single loss)."""
    return _single_impl(tuple(d_vectors), simmat, W, gamma=gamma, max_sim=max_sim)


def sim_matrix_loss_batched(x, simmat, W, gamma=1.0, max_sim=1.0):
    """Batched variant: x is (G, L, Ns, D); returns (G,) losses from one pallas_call."""
    return _batched_impl(x, simmat, W, gamma=gamma, max_sim=max_sim)


def reference_loss(d_vectors, simmat, W, gamma=1.0, max_sim=1.0):
    """Pure-JAX mirror of the PyTorch forward, for verification."""
    Ns = d_vectors[0].shape[0]
    L = len(d_vectors)
    utter = jnp.stack(d_vectors).transpose(1, 2, 0)               # (Ns, D, L)
    ks = []
    for i in range(Ns):
        diff = utter - utter[i]
        norm = jnp.sqrt(jnp.sum(diff * diff, axis=1, keepdims=True))   # (Ns, 1, L)
        ks.append(jnp.exp(-gamma * norm))
    Kd = jnp.concatenate(ks, axis=1)                              # (Ns, Ns, L)
    S = jnp.broadcast_to(simmat[:Ns, :Ns][:, :, None], (Ns, Ns, L))
    Wp = jnp.broadcast_to(W[:Ns, :Ns][:, :, None], (Ns, Ns, L))
    I = jnp.broadcast_to(jnp.eye(Ns)[:, :, None], (Ns, Ns, L))
    denom = jnp.sqrt(jnp.sum((Wp - I) ** 2))
    S_t = S - max_sim * I
    Kd_t = Kd - Kd * I
    numer = jnp.sqrt(jnp.sum((Wp * (Kd_t - S_t)) ** 2))
    return 2.0 * numer / denom


if __name__ == "__main__":
    key = jax.random.PRNGKey(0)
    NS_TOTAL, NS, L, D = 16, 8, 4, 32   # speakers in csv, speakers per batch, utterances, embed dim
    GROUPS = 8                          # groups for the batched (grid) path

    k_sim, k_dv, k_batch = jax.random.split(key, 3)

    # Deterministic stand-in for the CSV similarity matrix (__init__ glue).
    # TODO(synk): pd.read_csv / sklearn MinMaxScaler fit done here in plain JAX, not in-kernel.
    raw = jax.random.uniform(k_sim, (NS_TOTAL, NS_TOTAL), minval=-0.25, maxval=1.0)
    W_full = (raw > 0).astype(jnp.float32)
    mn = raw.min(axis=0, keepdims=True)
    mx = raw.max(axis=0, keepdims=True)
    simmat_full = (raw - mn) / (mx - mn)  # column-wise min-max scaling to [0, 1]

    dkeys = jax.random.split(k_dv, L)
    d_vectors = [jax.random.normal(dk, (NS, D), jnp.float32) for dk in dkeys]

    # Single-loss path (matches the PyTorch forward).
    loss = jax.block_until_ready(sim_matrix_loss(d_vectors, simmat_full, W_full, gamma=1.0))
    ref = reference_loss(d_vectors, simmat_full, W_full, gamma=1.0)
    assert bool(jnp.isfinite(loss))
    assert abs(float(loss) - float(ref)) <= 1e-4 * max(1.0, abs(float(ref)))

    # Batched path: GROUPS losses, GB=4 groups per grid step, 2 grid blocks.
    xb = jax.random.normal(k_batch, (GROUPS, L, NS, D), jnp.float32)
    losses = jax.block_until_ready(
        sim_matrix_loss_batched(xb, simmat_full, W_full, gamma=1.0))
    for g in range(GROUPS):
        ref_g = reference_loss([xb[g, l] for l in range(L)], simmat_full, W_full, gamma=1.0)
        assert abs(float(losses[g]) - float(ref_g)) <= 1e-4 * max(1.0, abs(float(ref_g)))

    # Ragged group count exercises the zero-padding path (5 -> padded to 8).
    losses5 = jax.block_until_ready(
        sim_matrix_loss_batched(xb[:5], simmat_full, W_full, gamma=1.0))
    for g in range(5):
        ref_g = reference_loss([xb[g, l] for l in range(L)], simmat_full, W_full, gamma=1.0)
        assert abs(float(losses5[g]) - float(ref_g)) <= 1e-4 * max(1.0, abs(float(ref_g)))

    # bf16 embeddings stay bf16 through the DMA; Gram runs bf16 -> f32 on the MXU.
    xb16 = xb.astype(jnp.bfloat16)
    losses16 = jax.block_until_ready(
        sim_matrix_loss_batched(xb16, simmat_full, W_full, gamma=1.0))
    for g in range(GROUPS):
        ref_g = reference_loss([xb16[g, l].astype(jnp.float32) for l in range(L)],
                               simmat_full, W_full, gamma=1.0)
        assert abs(float(losses16[g]) - float(ref_g)) <= 5e-3 * max(1.0, abs(float(ref_g)))

    print("KERNEL_OK")
</pallas_src>

<mosaic_0001>
module attributes {stable_mosaic.version = 11 : i64} {
  func.func @_sim_matrix_loss_kernel(%arg0: i32, %arg1: memref<32x32xf32, #tpu.memory_space<vmem>>, %arg2: memref<32x32xf32, #tpu.memory_space<vmem>>, %arg3: memref<32x32xf32, #tpu.memory_space<vmem>>, %arg4: memref<1x32xf32, #tpu.memory_space<vmem>>, %arg5: memref<1x1x1xf32, #tpu.memory_space<vmem>>) attributes {dimension_semantics = [#tpu.dimension_semantics<parallel>], iteration_bounds = array<i64: 1>, scalar_prefetch = 0 : i64, scratch_operands = 0 : i64, tpu.core_type = #tpu.core_type<tc>, window_params = [{transform_indices = @transform_0, window_bounds = array<i64: 32, 32>}, {pipeline_mode = #tpu.pipeline_mode<synchronous>, transform_indices = @transform_1, window_bounds = array<i64: 32, 32>}, {pipeline_mode = #tpu.pipeline_mode<synchronous>, transform_indices = @transform_2, window_bounds = array<i64: 32, 32>}, {pipeline_mode = #tpu.pipeline_mode<synchronous>, transform_indices = @transform_3, window_bounds = array<i64: 1, 32>}, {transform_indices = @transform_4, window_bounds = array<i64: 1, 1, 1>}]} {
    %c0 = arith.constant 0 : index
    %c0_0 = arith.constant 0 : index
    %0 = vector.load %arg1[%c0, %c0_0] : memref<32x32xf32, #tpu.memory_space<vmem>>, vector<32x32xf32>
    %cst = arith.constant dense<0.000000e+00> : vector<32x32xf32>
    %1 = tpu.matmul %0, %0, %cst {dimension_numbers = #tpu.dot_dimension_numbers<[1], [1], [0], [0], [0, 0, 1, 0], [], []>} : vector<32x32xf32>, vector<32x32xf32>, vector<32x32xf32> -> vector<32x32xf32>
    %2 = arith.mulf %0, %0 : vector<32x32xf32>
    %cst_1 = arith.constant dense<0.000000e+00> : vector<32xf32>
    %3 = vector.multi_reduction <add>, %2, %cst_1 [1] : vector<32x32xf32> to vector<32xf32>
    %4 = vector.shape_cast %3 : vector<32xf32> to vector<32x1xf32>
    %5 = tpu.iota {dimensions = array<i32: 0>} : vector<32x32xi32>
    %6 = tpu.iota {dimensions = array<i32: 1>} : vector<32x32xi32>
    %7 = arith.cmpi eq, %5, %6 : vector<32x32xi32>
    %8 = arith.extui %7 : vector<32x32xi1> to vector<32x32xi32>
    %9 = arith.sitofp %8 : vector<32x32xi32> to vector<32x32xf32>
    %10 = arith.mulf %1, %9 : vector<32x32xf32>
    %cst_2 = arith.constant dense<0.000000e+00> : vector<32xf32>
    %11 = vector.multi_reduction <add>, %10, %cst_2 [0] : vector<32x32xf32> to vector<32xf32>
    %12 = vector.shape_cast %11 : vector<32xf32> to vector<1x32xf32>
    %13 = vector.broadcast %4 : vector<32x1xf32> to vector<32x32xf32>
    %14 = vector.broadcast %12 : vector<1x32xf32> to vector<32x32xf32>
    %15 = arith.addf %13, %14 : vector<32x32xf32>
    %cst_3 = arith.constant 2.000000e+00 : f32
    %16 = vector.broadcast %cst_3 : f32 to vector<32x32xf32>
    %17 = arith.mulf %16, %1 : vector<32x32xf32>
    %18 = arith.subf %15, %17 : vector<32x32xf32>
    %cst_4 = arith.constant 0.000000e+00 : f32
    %19 = vector.broadcast %cst_4 : f32 to vector<32x32xf32>
    %20 = arith.maximumf %18, %19 : vector<32x32xf32>
    %21 = math.sqrt %20 : vector<32x32xf32>
    %cst_5 = arith.constant -1.000000e+00 : f32
    %22 = vector.broadcast %cst_5 : f32 to vector<32x32xf32>
    %23 = arith.mulf %22, %21 : vector<32x32xf32>
    %24 = math.exp %23 : vector<32x32xf32>
    %c0_6 = arith.constant 0 : index
    %c0_7 = arith.constant 0 : index
    %25 = vector.load %arg2[%c0_6, %c0_7] : memref<32x32xf32, #tpu.memory_space<vmem>>, vector<32x32xf32>
    %26 = arith.mulf %25, %24 : vector<32x32xf32>
    %c0_8 = arith.constant 0 : index
    %c0_9 = arith.constant 0 : index
    %27 = vector.load %arg3[%c0_8, %c0_9] : memref<32x32xf32, #tpu.memory_space<vmem>>, vector<32x32xf32>
    %28 = arith.subf %26, %27 : vector<32x32xf32>
    %29 = arith.mulf %28, %28 : vector<32x32xf32>
    %c0_10 = arith.constant 0 : index
    %c0_11 = arith.constant 0 : index
    %30 = vector.load %arg4[%c0_10, %c0_11] : memref<1x32xf32, #tpu.memory_space<vmem>>, vector<1x32xf32>
    %cst_12 = arith.constant dense<0.000000e+00> : vector<1x32xf32>
    %31 = tpu.matmul %30, %29, %cst_12 {dimension_numbers = #tpu.dot_dimension_numbers<[1], [0], [0], [1], [0, 0, 1, 1], [], []>} : vector<1x32xf32>, vector<32x32xf32>, vector<1x32xf32> -> vector<1x32xf32>
    %cst_13 = arith.constant dense<0.000000e+00> : vector<1xf32>
    %32 = vector.multi_reduction <add>, %31, %cst_13 [1] : vector<1x32xf32> to vector<1xf32>
    %33 = vector.shape_cast %32 : vector<1xf32> to vector<1x1xf32>
    %34 = math.sqrt %33 : vector<1x1xf32>
    %35 = vector.shape_cast %34 : vector<1x1xf32> to vector<1x1x1xf32>
    %c0_14 = arith.constant 0 : index
    %c0_15 = arith.constant 0 : index
    %c0_16 = arith.constant 0 : index
    %36 = vector.load %arg5[%c0_14, %c0_15, %c0_16] : memref<1x1x1xf32, #tpu.memory_space<vmem>>, vector<1x1x1xf32>
    tpu.vector_store %arg5[%c0_14, %c0_15, %c0_16], %35 {strides = array<i32>} : memref<1x1x1xf32, #tpu.memory_space<vmem>>, vector<1x1x1xf32>,
    return
  }
  func.func @transform_0(%arg0: i32) -> (i32, i32) {
    %c0_i32 = arith.constant 0 : i32
    %c0_i32_0 = arith.constant 0 : i32
    return %arg0, %c0_i32 : i32, i32
  }
  func.func @transform_1(%arg0: i32) -> (i32, i32) {
    %c0_i32 = arith.constant 0 : i32
    %c0_i32_0 = arith.constant 0 : i32
    %c0_i32_1 = arith.constant 0 : i32
    return %c0_i32, %c0_i32_0 : i32, i32
  }
  func.func @transform_2(%arg0: i32) -> (i32, i32) {
    %c0_i32 = arith.constant 0 : i32
    %c0_i32_0 = arith.constant 0 : i32
    %c0_i32_1 = arith.constant 0 : i32
    return %c0_i32, %c0_i32_0 : i32, i32
  }
  func.func @transform_3(%arg0: i32) -> (i32, i32) {
    %c0_i32 = arith.constant 0 : i32
    %c0_i32_0 = arith.constant 0 : i32
    %c0_i32_1 = arith.constant 0 : i32
    return %c0_i32, %c0_i32_0 : i32, i32
  }
  func.func @transform_4(%arg0: i32) -> (i32, i32, i32) {
    %c0_i32 = arith.constant 0 : i32
    %c0_i32_0 = arith.constant 0 : i32
    %c0_i32_1 = arith.constant 0 : i32
    return %arg0, %c0_i32, %c0_i32_0 : i32, i32, i32
  }
}

</mosaic_0001>

<llo_original>
// kernel: _single_impl.1
$region0: #{_single_impl.1}
  #allocation0 [shape = 'u32[]', space=smem, size = 0x4, offset = 0x4, fixed_abs, tag = 'smem constant byte address 0x4 - core index']
  #allocation1 [shape = 'u32[144,128]{1,0:T(1,128)}', space=vmem, size = 0x12000, scoped, tag = 'internal scratch']
  %s0 = inlined_call_operand.vmem [shape: f32[32,32], index: 0, kind: input, shape index: {}]
  %s1 = inlined_call_operand.vmem [shape: f32[32,32], index: 1, kind: input, shape index: {}]
  %s2 = inlined_call_operand.vmem [shape: f32[32,32], index: 2, kind: input, shape index: {}]
  %s3 = inlined_call_operand.vmem [shape: f32[1,32], index: 3, kind: input, shape index: {}]
  %s4 = inlined_call_operand.hbm [shape: f32[1,1,1], index: 4, kind: output, shape index: {}]
  %s5 = sld [smem:[#allocation0]]
  $region26: #{_single_impl.1} parent=0
    _
  %s7 = ssub.s32 1, %s5
  %s8 = scalar_select 0, %s7, %s5
  $region1: #{_single_impl.1} parent=0
    #allocation2 [shape = 'u8[512]{0}', space=vmem, size = 0x400, scoped, tag = 'output window, operand 0, single buffered']
    #allocation3 [shape = 's32[1]{0}', space=sflag, size = 0x4, scoped, tag = 'scoped memory for _single_impl.1']
    %9 = vsyncpa [#allocation3], 0
    // Predicated region
    $region2: #{_single_impl.1} parent=1 // pred_check
      _
    $region3: #{_single_impl.1} parent=1 // pred_check_branch
      %11 = sbr.rel (0) target = $region5
    $region4: #{_single_impl.1} parent=1 // pred_region
      _
    $region5: #{_single_impl.1} parent=1 // pred_fallthru
      _
    // Predicated region
    $region6: #{_single_impl.1} parent=1 // pred_check
      _
    $region7: #{_single_impl.1} parent=1 // pred_check_branch
      %13 = sbr.rel (0) target = $region9
    $region8: #{_single_impl.1} parent=1 // pred_region
      _
    $region9: #{_single_impl.1} parent=1 // pred_fallthru
      _
    // Predicated region
    $region10: #{_single_impl.1} parent=1 // pred_check
      _
    $region11: #{_single_impl.1} parent=1 // pred_check_branch
      %15 = sbr.rel (0) target = $region13
    $region12: #{_single_impl.1} parent=1 // pred_region
      _
    $region13: #{_single_impl.1} parent=1 // pred_fallthru
      _
    // Predicated region
    $region14: #{_single_impl.1} parent=1 // pred_check
      _
    $region15: #{_single_impl.1} parent=1 // pred_check_branch
      %17 = sbr.rel (0) target = $region17
    $region16: #{_single_impl.1} parent=1 // pred_region
      _
    $region17: #{_single_impl.1} parent=1 // pred_fallthru
      _
    %v18 = vld [vmem:[%s0] sm:$0xff]
    %v19 = vld [vmem:[%s0 + $0x8] sm:$0xff]
    %v20 = vld [vmem:[%s0 + $0x10] sm:$0xff]
    %v21 = vld [vmem:[%s0 + $0x18] sm:$0xff]
    %vm22 = vcmask 261120
    %v24 = vsel %vm22, %v18, 0
    %v27 = vsel %vm22, %v19, 0
    %v30 = vsel %vm22, %v20, 0
    %v33 = vsel %vm22, %v21, 0
    %35 = vmatprep.subr.mxu0 0.0
    %36 = vmatpush1.xpose.msra.mxu0 %v24
    %37 = vmatprep.subr.mxu0 0.0
    %38 = vmatpush1.xpose.msra.mxu0 %v27
    %39 = vmatprep.subr.mxu0 0.0
    %40 = vmatpush1.xpose.msra.mxu0 %v30
    %41 = vmatprep.subr.mxu0 0.0
    %42 = vmatpush1.xpose.msra.mxu0 %v33
    %43 = vmatprep.subr.mxu0 0.0
    %44 = vmatpush1.xpose.msra.mxu0 0.0
    %45 = vmatprep.subr.mxu0 0.0
    %46 = vmatpush1.xpose.msra.mxu0 0.0
    %47 = vmatprep.subr.mxu0 0.0
    %48 = vmatpush1.xpose.msra.mxu0 0.0
    %49 = vmatprep.subr.mxu0 0.0
    %50 = vmatpush1.xpose.msra.mxu0 0.0
    %51 = vmatprep.subr.mxu0 0.0
    %52 = vmatpush1.xpose.msra.mxu0 0.0
    %53 = vmatprep.subr.mxu0 0.0
    %54 = vmatpush1.xpose.msra.mxu0 0.0
    %55 = vmatprep.subr.mxu0 0.0
    %56 = vmatpush1.xpose.msra.mxu0 0.0
    %57 = vmatprep.subr.mxu0 0.0
    %58 = vmatpush1.xpose.msra.mxu0 0.0
    %59 = vmatprep.subr.mxu0 0.0
    %60 = vmatpush1.xpose.msra.mxu0 0.0
    %61 = vmatprep.subr.mxu0 0.0
    %62 = vmatpush1.xpose.msra.mxu0 0.0
    %63 = vmatprep.subr.mxu0 0.0
    %64 = vmatpush1.xpose.msra.mxu0 0.0
    %65 = vmatprep.subr.mxu0 0.0
    %66 = vmatpush1.xpose.msra.mxu0 0.0
    %67 = vmatprep.subr.mxu0 0.0
    %68 = vmatpush1.xpose.msra.mxu0 0.0
    %69 = vmatprep.subr.mxu0 0.0
    %70 = vmatpush1.xpose.msra.mxu0 0.0
    %71 = vmatprep.subr.mxu0 0.0
    %72 = vmatpush1.xpose.msra.mxu0 0.0
    %73 = vmatprep.subr.mxu0 0.0
    %74 = vmatpush1.xpose.msra.mxu0 0.0
    %75 = vmatprep.subr.mxu0 0.0
    %76 = vmatpush1.xpose.msra.mxu0 0.0
    %77 = vmatprep.subr.mxu0 0.0
    %78 = vmatpush1.xpose.msra.mxu0 0.0
    %79 = vmatprep.subr.mxu0 0.0
    %80 = vmatpush1.xpose.msra.mxu0 0.0
    %81 = vmatprep.subr.mxu0 0.0
    %82 = vmatpush1.xpose.msra.mxu0 0.0
    %83 = vmatprep.subr.mxu0 0.0
    %84 = vmatpush1.xpose.msra.mxu0 0.0
    %85 = vmatprep.subr.mxu0 0.0
    %86 = vmatpush1.xpose.msra.mxu0 0.0
    %87 = vmatprep.subr.mxu0 0.0
    %88 = vmatpush1.xpose.msra.mxu0 0.0
    %89 = vmatprep.subr.mxu0 0.0
    %90 = vmatpush1.xpose.msra.mxu0 0.0
    %91 = vmatprep.subr.mxu0 0.0
    %92 = vmatpush1.xpose.msra.mxu0 0.0
    %93 = vmatprep.subr.mxu0 0.0
    %94 = vmatpush1.xpose.msra.mxu0 0.0
    %95 = vmatprep.subr.mxu0 0.0
    %96 = vmatpush1.xpose.msra.mxu0 0.0
    %97 = vmatprep.subr.mxu0 0.0
    %98 = vmatpush1.xpose.msra.mxu0 0.0
    %99 = vmatprep.mubr.f32.mxu0 0.0
    %100 = vmatmul.mubr.f32.gmra.mrb[0].mxu0 %v24
    %v101 = vpop.f32.mrb[0].mxu0
    %v102 = vadd.f32 0.0, %v101
    %v103 = vpop.f32.mrb[0].mxu0
    %104 = vmatprep.mubr.f32.mxu0 0.0
    %105 = vmatmul.mubr.f32.gmra.mrb[0].mxu0 %v27
    %v106 = vpop.f32.mrb[0].mxu0
    %v107 = vadd.f32 0.0, %v106
    %v108 = vpop.f32.mrb[0].mxu0
    %109 = vmatprep.mubr.f32.mxu0 0.0
    %110 = vmatmul.mubr.f32.gmra.mrb[0].mxu0 %v30
    %v111 = vpop.f32.mrb[0].mxu0
    %v112 = vadd.f32 0.0, %v111
    %v113 = vpop.f32.mrb[0].mxu0
    %114 = vmatprep.mubr.f32.mxu0 0.0
    %115 = vmatmul.mubr.f32.gmra.mrb[0].mxu0 %v33
    %v116 = vpop.f32.mrb[0].mxu0
    %v117 = vadd.f32 0.0, %v116
    %v118 = vpop.f32.mrb[0].mxu0
    %119 = vdwg.mxu0
    %v120 = vmul.f32 %v18, %v18
    %v121 = vmul.f32 %v19, %v19
    %v122 = vmul.f32 %v20, %v20
    %v123 = vmul.f32 %v21, %v21
    %v124 = vsel %vm22, %v120, 0.0
    %125 = vadd.xlane.f32.xlu0 %v124
    %v126 = vpop.xlane.xlu0 %125
    %v127 = vsel %vm22, %v121, 0.0
    %128 = vadd.xlane.f32.xlu0 %v127
    %v129 = vpop.xlane.xlu0 %128
    %v130 = vsel %vm22, %v122, 0.0
    %131 = vadd.xlane.f32.xlu0 %v130
    %v132 = vpop.xlane.xlu0 %131
    %v133 = vsel %vm22, %v123, 0.0
    %134 = vadd.xlane.f32.xlu0 %v133
    %v135 = vpop.xlane.xlu0 %134
    %v136 = vlaneseq
    %v137 = vshrl.u32 %v136, 7
    %v138 = vadd.s32 %v137, 8
    %v139 = vadd.s32 %v137, 16
    %v140 = vadd.s32 %v137, 24
    %v141 = vlaneseq
    %v142 = vand.u32 %v141, 127
    %vm143 = vcmp.eq.s32.totalorder %v137, %v142
    %vm144 = vcmp.eq.s32.totalorder %v138, %v142
    %vm145 = vcmp.eq.s32.totalorder %v139, %v142
    %vm146 = vcmp.eq.s32.totalorder %v140, %v142
    %v147 = vsel %vm143, 1, 0
    %v148 = vsel %vm144, 1, 0
    %v149 = vsel %vm145, 1, 0
    %v150 = vsel %vm146, 1, 0
    %v151 = vcvt.s32.f32 %v147
    %v152 = vcvt.s32.f32 %v148
    %v153 = vcvt.s32.f32 %v149
    %v154 = vcvt.s32.f32 %v150
    %v155 = vmul.f32 %v102, %v151
    %v156 = vmul.f32 %v107, %v152
    %v157 = vmul.f32 %v112, %v153
    %v158 = vmul.f32 %v117, %v154
    %v159 = vsel %vm22, %v155, 0.0
    %v160 = vsel %vm22, %v156, 0.0
    %v161 = vadd.f32 %v159, %v160
    %v162 = vsel %vm22, %v157, 0.0
    %v163 = vadd.f32 %v161, %v162
    %v164 = vsel %vm22, %v158, 0.0
    %v165 = vadd.f32 %v163, %v164
    %v166 = vrot.slane %v165, 4
    %v167 = vadd.f32 %v165, %v166
    %v168 = vrot.slane %v167, 2
    %v169 = vadd.f32 %v167, %v168
    %v170 = vrot.slane %v169, 1
    %v171 = vadd.f32 %v169, %v170
    %v172 = vadd.f32 %v126, %v171
    %v173 = vadd.f32 %v129, %v171
    %v174 = vadd.f32 %v132, %v171
    %v175 = vadd.f32 %v135, %v171
    %v176 = vmul.f32 %v102, 2.0
    %v177 = vmul.f32 %v107, 2.0
    %v178 = vmul.f32 %v112, 2.0
    %v179 = vmul.f32 %v117, 2.0
    %v180 = vsub.f32 %v172, %v176
    %v181 = vsub.f32 %v173, %v177
    %v182 = vsub.f32 %v174, %v178
    %v183 = vsub.f32 %v175, %v179
    %v184 = vmax.f32 %v180, 0.0
    %v185 = vmax.f32 %v181, 0.0
    %v186 = vmax.f32 %v182, 0.0
    %v187 = vmax.f32 %v183, 0.0
    %v188 = vrsqrt.pop %v184
    %v189 = vmul.f32 %v184, %v188
    %vm190 = vcmp.eq.f32.partialorder %v184, inf
    %v191 = vsel %vm190, %v184, %v189
    %vm192 = vcmp.eq.f32.partialorder %v184, 0.0
    %v193 = vand.u32 %v184, 2147483648
    %v194 = vsel %vm192, %v193, %v191
    %v195 = vrsqrt.pop %v185
    %v196 = vmul.f32 %v185, %v195
    %vm197 = vcmp.eq.f32.partialorder %v185, inf
    %v198 = vsel %vm197, %v185, %v196
    %vm199 = vcmp.eq.f32.partialorder %v185, 0.0
    %v200 = vand.u32 %v185, 2147483648
    %v201 = vsel %vm199, %v200, %v198
    %v202 = vrsqrt.pop %v186
    %v203 = vmul.f32 %v186, %v202
    %vm204 = vcmp.eq.f32.partialorder %v186, inf
    %v205 = vsel %vm204, %v186, %v203
    %vm206 = vcmp.eq.f32.partialorder %v186, 0.0
    %v207 = vand.u32 %v186, 2147483648
    %v208 = vsel %vm206, %v207, %v205
    %v209 = vrsqrt.pop %v187
    %v210 = vmul.f32 %v187, %v209
    %vm211 = vcmp.eq.f32.partialorder %v187, inf
    %v212 = vsel %vm211, %v187, %v210
    %vm213 = vcmp.eq.f32.partialorder %v187, 0.0
    %v214 = vand.u32 %v187, 2147483648
    %v215 = vsel %vm213, %v214, %v212
    %v216 = vmul.f32 %v194, -1.0
    %v217 = vmul.f32 %v201, -1.0
    %v218 = vmul.f32 %v208, -1.0
    %v219 = vmul.f32 %v215, -1.0
    %v220 = vmul.f32 %v216, 1.442695
    %v221 = vpow.pop %v220
    %v222 = vmul.f32 %v217, 1.442695
    %v223 = vpow.pop %v222
    %v224 = vmul.f32 %v218, 1.442695
    %v225 = vpow.pop %v224
    %v226 = vmul.f32 %v219, 1.442695
    %v227 = vpow.pop %v226
    %v228 = vld [vmem:[%s1] sm:$0xff]
    %v229 = vld [vmem:[%s1 + $0x8] sm:$0xff]
    %v230 = vld [vmem:[%s1 + $0x10] sm:$0xff]
    %v231 = vld [vmem:[%s1 + $0x18] sm:$0xff]
    %v232 = vmul.f32 %v228, %v221
    %v233 = vmul.f32 %v229, %v223
    %v234 = vmul.f32 %v230, %v225
    %v235 = vmul.f32 %v231, %v227
    %v236 = vld [vmem:[%s2] sm:$0xff]
    %v237 = vld [vmem:[%s2 + $0x8] sm:$0xff]
    %v238 = vld [vmem:[%s2 + $0x10] sm:$0xff]
    %v239 = vld [vmem:[%s2 + $0x18] sm:$0xff]
    %v240 = vsub.f32 %v232, %v236
    %v241 = vsub.f32 %v233, %v237
    %v242 = vsub.f32 %v234, %v238
    %v243 = vsub.f32 %v235, %v239
    %v244 = vmul.f32 %v240, %v240
    %v245 = vmul.f32 %v241, %v241
    %v246 = vmul.f32 %v242, %v242
    %v247 = vmul.f32 %v243, %v243
    %v248 = vld [vmem:[%s3] sm:$0x1]
    %v250 = vsel %vm22, %v248, 0
    %252 = vmatprep.subr.mxu0 0.0
    %253 = vmatpush1.msra.mxu0 %v244
    %254 = vmatprep.subr.mxu0 0.0
    %255 = vmatpush1.msra.mxu0 %v245
    %256 = vmatprep.subr.mxu0 0.0
    %257 = vmatpush1.msra.mxu0 %v246
    %258 = vmatprep.subr.mxu0 0.0
    %259 = vmatpush1.msra.mxu0 %v247
    %260 = vmatprep.subr.mxu0 0.0
    %261 = vmatpush1.msra.mxu0 0.0
    %262 = vmatprep.subr.mxu0 0.0
    %263 = vmatpush1.msra.mxu0 0.0
    %264 = vmatprep.subr.mxu0 0.0
    %265 = vmatpush1.msra.mxu0 0.0
    %266 = vmatprep.subr.mxu0 0.0
    %267 = vmatpush1.msra.mxu0 0.0
    %268 = vmatprep.subr.mxu0 0.0
    %269 = vmatpush1.msra.mxu0 0.0
    %270 = vmatprep.subr.mxu0 0.0
    %271 = vmatpush1.msra.mxu0 0.0
    %272 = vmatprep.subr.mxu0 0.0
    %273 = vmatpush1.msra.mxu0 0.0
    %274 = vmatprep.subr.mxu0 0.0
    %275 = vmatpush1.msra.mxu0 0.0
    %276 = vmatprep.subr.mxu0 0.0
    %277 = vmatpush1.msra.mxu0 0.0
    %278 = vmatprep.subr.mxu0 0.0
    %279 = vmatpush1.msra.mxu0 0.0
    %280 = vmatprep.subr.mxu0 0.0
    %281 = vmatpush1.msra.mxu0 0.0
    %282 = vmatprep.subr.mxu0 0.0
    %283 = vmatpush1.msra.mxu0 0.0
    %284 = vmatprep.subr.mxu0 0.0
    %285 = vmatpush1.msra.mxu0 0.0
    %286 = vmatprep.subr.mxu0 0.0
    %287 = vmatpush1.msra.mxu0 0.0
    %288 = vmatprep.subr.mxu0 0.0
    %289 = vmatpush1.msra.mxu0 0.0
    %290 = vmatprep.subr.mxu0 0.0
    %291 = vmatpush1.msra.mxu0 0.0
    %292 = vmatprep.subr.mxu0 0.0
    %293 = vmatpush1.msra.mxu0 0.0
    %294 = vmatprep.subr.mxu0 0.0
    %295 = vmatpush1.msra.mxu0 0.0
    %296 = vmatprep.subr.mxu0 0.0
    %297 = vmatpush1.msra.mxu0 0.0
    %298 = vmatprep.subr.mxu0 0.0
    %299 = vmatpush1.msra.mxu0 0.0
    %300 = vmatprep.subr.mxu0 0.0
    %301 = vmatpush1.msra.mxu0 0.0
    %302 = vmatprep.subr.mxu0 0.0
    %303 = vmatpush1.msra.mxu0 0.0
    %304 = vmatprep.subr.mxu0 0.0
    %305 = vmatpush1.msra.mxu0 0.0
    %306 = vmatprep.subr.mxu0 0.0
    %307 = vmatpush1.msra.mxu0 0.0
    %308 = vmatprep.subr.mxu0 0.0
    %309 = vmatpush1.msra.mxu0 0.0
    %310 = vmatprep.subr.mxu0 0.0
    %311 = vmatpush1.msra.mxu0 0.0
    %312 = vmatprep.subr.mxu0 0.0
    %313 = vmatpush1.msra.mxu0 0.0
    %314 = vmatprep.subr.mxu0 0.0
    %315 = vmatpush1.msra.mxu0 0.0
    %316 = vmatprep.mubr.f32.mxu0 0.0
    %317 = vmatmul.mubr.f32.gmra.mrb[0].mxu0 %v250
    %v318 = vpop.f32.mrb[0].mxu0
    %v319 = vadd.f32 0.0, %v318
    %v320 = vpop.f32.mrb[0].mxu0
    %321 = vdwg.mxu0
    %vm322 = vcmask 253952
    %v323 = vsel %vm322, %v319, 0.0
    %324 = vadd.xlane.f32.xlu0 %v323
    %v325 = vpop.xlane.xlu0 %324
    %v326 = vrsqrt.pop %v325
    %v327 = vmul.f32 %v325, %v326
    %vm328 = vcmp.eq.f32.partialorder %v325, inf
    %v329 = vsel %vm328, %v325, %v327
    %vm330 = vcmp.eq.f32.partialorder %v325, 0.0
    %v331 = vand.u32 %v325, 2147483648
    %v332 = vsel %vm330, %v331, %v329
    %vm333 = vcmask 0
    %334 = vst.msk [vmem:[#allocation2] sm:$0x1] %vm333, %v332
    // Predicated region
    $region18: #{_single_impl.1} parent=1 // pred_check
      _
    $region19: #{_single_impl.1} parent=1 // pred_check_branch
      %336 = sbr.rel (0) target = $region21
    $region20: #{_single_impl.1} parent=1 // pred_region
      %s338 = ssub.s32 16, 16
      %339 = vsyncadd [#allocation3], %s338
      %s341 = sshll.u32 [#allocation2], 4
      %s342 = int_to_ptr.vmem [resolvable:$true] %s341
      %344 = dma.vmem_to_hbm [thread:$0]  %s342, 16, %s4, [#allocation3]
    $region21: #{_single_impl.1} parent=1 // pred_fallthru
      _
    // Predicated region
    $region22: #{_single_impl.1} parent=1 // pred_check
      _
    $region23: #{_single_impl.1} parent=1 // pred_check_branch
      %346 = sbr.rel (0) target = $region25
    $region24: #{_single_impl.1} parent=1 // pred_region
      %347 = dma.done [#allocation3], 16
    $region25: #{_single_impl.1} parent=1 // pred_fallthru
      _
    %348 = vsyncpa [#allocation3], 1

</llo_original>
